<compile_context>
chip_gen: v6e
topology: v6e:2x2x1
jax: 0.10.0
libtpu: 0.0.40
codegen_flags: <defaults>
</compile_context>

<pallas_src>
import jax
import jax.numpy as jnp
from jax.experimental import pallas as pl
from jax.experimental.pallas import tpu as pltpu

_BN_EPS = 1e-5


def mlp_kernel(x_ref, w1_ref, w2_ref, w3_ref, w4_ref, slab_ref, o_ref):
    # Resident f32 slab rows (static slices of a VMEM ref are free views):
    c1 = slab_ref[0:1, :]            # (1, 256) folded bias, layer 1
    c2 = slab_ref[1:2, :]            # (1, 256) folded bias, layer 2
    c3 = slab_ref[2:3, 0:128]        # (1, 128) folded bias, layer 3
    c4 = slab_ref[3:4, 0:128]        # (1, 128) folded bias, layer 4 (lane 64 == 1.0)
    w5 = slab_ref[4:5, 0:128]        # (1, 128) fc5 weights   (lane 64 == b5)

    # In-kernel f32 -> bf16 cast of the activation tile (free VPU work; avoids
    # a separate wrapper-side HBM cast pass).
    h = x_ref[...].astype(jnp.bfloat16)

    a = jnp.dot(h, w1_ref[...], preferred_element_type=jnp.float32) + c1
    h = jnp.maximum(a, 0.0).astype(jnp.bfloat16)          # fc1 + bn1 + relu

    a = jnp.dot(h, w2_ref[...], preferred_element_type=jnp.float32) + c2
    h = jnp.maximum(a, 0.0).astype(jnp.bfloat16)          # fc2 + bn2 + relu

    a = jnp.dot(h, w3_ref[...], preferred_element_type=jnp.float32) + c3
    h = jnp.maximum(a, 0.0).astype(jnp.bfloat16)          # fc3 + bn3 + relu

    a = jnp.dot(h, w4_ref[...], preferred_element_type=jnp.float32) + c4
    h = jnp.maximum(a, 0.0)                               # fc4 + bn4 + relu (f32, lane 64 == 1.0)

    # fc5 + bias + sigmoid as an f32 lane reduction (bias rides on lane 64).
    logit = jnp.sum(h * w5, axis=-1, keepdims=True)
    o_ref[...] = jax.nn.sigmoid(logit)


def _round_up(x, m):
    return ((x + m - 1) // m) * m


def _choose_tm(B):
    """Batch-tile size: amortize per-grid-step overhead (large tiles) while
    keeping >=2 grid steps when possible so v7x can use both TensorCores."""
    if B <= 16:
        return _round_up(B, 8)                 # tiny batch: single strip
    return min(1024, _round_up(pl.cdiv(B, 2), 16))


def _fold_bn(W, b, gamma, beta, mean, var):
    """Fold eval-mode BatchNorm into the preceding Linear (W is [in, out])."""
    scale = gamma * jax.lax.rsqrt(var + _BN_EPS)
    Wf = W * scale[None, :]
    cf = (b - mean) * scale + beta
    return Wf, cf


def mlp_binary_classifier(feature_pairs, params):
    """feature_pairs: [B, 2*input_dim] float32 -> [B] float32 probabilities."""
    B, D_in = feature_pairs.shape

    # ---- fold BatchNorm (running stats) into the Linear layers -------------
    w1, c1 = _fold_bn(params["w1"], params["b1"], params["bn1_gamma"],
                      params["bn1_beta"], params["bn1_mean"], params["bn1_var"])
    w2, c2 = _fold_bn(params["w2"], params["b2"], params["bn2_gamma"],
                      params["bn2_beta"], params["bn2_mean"], params["bn2_var"])
    w3, c3 = _fold_bn(params["w3"], params["b3"], params["bn3_gamma"],
                      params["bn3_beta"], params["bn3_mean"], params["bn3_var"])
    w4, c4 = _fold_bn(params["w4"], params["b4"], params["bn4_gamma"],
                      params["bn4_beta"], params["bn4_mean"], params["bn4_var"])

    # ---- pad D_in to a multiple of 128 (lane-dense x tile, aligned fc1 K) ---
    D_in_p = _round_up(D_in, 128)
    x = feature_pairs
    if D_in_p != D_in:
        x = jnp.pad(x, ((0, 0), (0, D_in_p - D_in)))
        w1 = jnp.pad(w1, ((0, D_in_p - D_in), (0, 0)))

    # ---- pad fc4's 64-wide output to 128 lanes ------------------------------
    # Padded w4 columns are zero; c4 lane 64 is 1.0 so relu output lane 64 is a
    # constant 1.0, and the fc5 slab row carries b5 in lane 64 -> the lane
    # reduction computes  x@w5 + b5  exactly.  Remaining padded lanes are 0.
    w4 = jnp.pad(w4, ((0, 0), (0, 64)))
    c4 = jnp.pad(c4, (0, 64)).at[64].set(1.0)
    w5_row = jnp.pad(params["w5"][:, 0], (0, 64)).at[64].set(params["b5"][0])

    # bf16 weights feed the MXU at full rate on all generations.
    w1, w2, w3, w4 = (w.astype(jnp.bfloat16) for w in (w1, w2, w3, w4))

    # ---- pack the tiny resident f32 vectors into one (8, 256) slab ----------
    slab = jnp.zeros((8, 256), jnp.float32)
    slab = slab.at[0, :].set(c1.astype(jnp.float32))
    slab = slab.at[1, :].set(c2.astype(jnp.float32))
    slab = slab.at[2, :128].set(c3.astype(jnp.float32))
    slab = slab.at[3, :128].set(c4.astype(jnp.float32))
    slab = slab.at[4, :128].set(w5_row.astype(jnp.float32))

    # ---- batch tiling --------------------------------------------------------
    tm = _choose_tm(B)
    Bp = _round_up(B, tm)
    if Bp != B:
        x = jnp.pad(x, ((0, Bp - B), (0, 0)))        # stays f32; cast in-kernel

    weights = [w1, w2, w3, w4, slab]

    def const_spec(arr):
        return pl.BlockSpec(arr.shape, lambda i: (0, 0))   # resident across grid

    flops = 2 * Bp * (D_in_p * 256 + 256 * 256 + 256 * 128 + 128 * 128 + 128)
    bytes_accessed = (int(x.size) * 4
                      + sum(int(w.size) * w.dtype.itemsize for w in weights)
                      + Bp * 4)

    out = pl.pallas_call(
        mlp_kernel,
        out_shape=jax.ShapeDtypeStruct((Bp, 1), jnp.float32),
        grid=(Bp // tm,),
        in_specs=[pl.BlockSpec((tm, D_in_p), lambda i: (i, 0))]
                 + [const_spec(w) for w in weights],
        out_specs=pl.BlockSpec((tm, 1), lambda i: (i, 0)),
        compiler_params=pltpu.CompilerParams(
            dimension_semantics=("parallel",),
            vmem_limit_bytes=32 * 1024 * 1024),
        cost_estimate=pl.CostEstimate(
            flops=flops, transcendentals=Bp, bytes_accessed=bytes_accessed),
    )(x, *weights)

    return out[:B, 0]   # == torch .squeeze(1)


def init_params(input_dim, key):
    """Deterministic synthetic parameters matching the module's shapes.
    Linear weights are stored pre-transposed as [in, out]."""
    dims = [(input_dim * 2, 256), (256, 256), (256, 128), (128, 64), (64, 1)]
    params = {}
    for i, (d_in, d_out) in enumerate(dims, start=1):
        key, kw, kb = jax.random.split(key, 3)
        bound = 1.0 / jnp.sqrt(d_in)
        params[f"w{i}"] = jax.random.uniform(
            kw, (d_in, d_out), jnp.float32, -bound, bound)
        params[f"b{i}"] = jax.random.uniform(
            kb, (d_out,), jnp.float32, -bound, bound)
        if i <= 4:  # BatchNorm1d after fc1..fc4
            key, kg, kbta, km, kv = jax.random.split(key, 5)
            params[f"bn{i}_gamma"] = 1.0 + 0.1 * jax.random.normal(kg, (d_out,), jnp.float32)
            params[f"bn{i}_beta"] = 0.1 * jax.random.normal(kbta, (d_out,), jnp.float32)
            params[f"bn{i}_mean"] = 0.1 * jax.random.normal(km, (d_out,), jnp.float32)
            params[f"bn{i}_var"] = jnp.abs(
                1.0 + 0.1 * jax.random.normal(kv, (d_out,), jnp.float32))
    return params


if __name__ == "__main__":
    key = jax.random.PRNGKey(0)
    input_dim = 64          # feature_pairs has 2 * input_dim = 128 features
    batch = 8

    key, kp, kx = jax.random.split(key, 3)
    params = init_params(input_dim, kp)
    feature_pairs = jax.random.normal(kx, (batch, 2 * input_dim), jnp.float32)

    probs = mlp_binary_classifier(feature_pairs, params)
    probs = jax.block_until_ready(probs)

    assert probs.shape == (batch,)
    assert bool(jnp.all(jnp.isfinite(probs)))
    assert bool(jnp.all((probs >= 0.0) & (probs <= 1.0)))
    print("KERNEL_OK")
</pallas_src>

<mosaic_0001>
module attributes {stable_mosaic.version = 11 : i64} {
  func.func @mlp_kernel(%arg0: i32, %arg1: memref<8x128xf32, #tpu.memory_space<vmem>>, %arg2: memref<128x256xbf16, #tpu.memory_space<vmem>>, %arg3: memref<256x256xbf16, #tpu.memory_space<vmem>>, %arg4: memref<256x128xbf16, #tpu.memory_space<vmem>>, %arg5: memref<128x128xbf16, #tpu.memory_space<vmem>>, %arg6: memref<8x256xf32, #tpu.memory_space<vmem>>, %arg7: memref<8x1xf32, #tpu.memory_space<vmem>>) attributes {dimension_semantics = [#tpu.dimension_semantics<parallel>], iteration_bounds = array<i64: 1>, scalar_prefetch = 0 : i64, scratch_operands = 0 : i64, tpu.core_type = #tpu.core_type<tc>, window_params = [{transform_indices = @transform_0, window_bounds = array<i64: 8, 128>}, {pipeline_mode = #tpu.pipeline_mode<synchronous>, transform_indices = @transform_1, window_bounds = array<i64: 128, 256>}, {pipeline_mode = #tpu.pipeline_mode<synchronous>, transform_indices = @transform_2, window_bounds = array<i64: 256, 256>}, {pipeline_mode = #tpu.pipeline_mode<synchronous>, transform_indices = @transform_3, window_bounds = array<i64: 256, 128>}, {pipeline_mode = #tpu.pipeline_mode<synchronous>, transform_indices = @transform_4, window_bounds = array<i64: 128, 128>}, {pipeline_mode = #tpu.pipeline_mode<synchronous>, transform_indices = @transform_5, window_bounds = array<i64: 8, 256>}, {transform_indices = @transform_6, window_bounds = array<i64: 8, 1>}]} {
    %c0 = arith.constant 0 : index
    %c0_0 = arith.constant 0 : index
    %0 = vector.load %arg6[%c0, %c0_0] : memref<8x256xf32, #tpu.memory_space<vmem>>, vector<1x256xf32>
    %c1 = arith.constant 1 : index
    %c0_1 = arith.constant 0 : index
    %1 = vector.load %arg6[%c1, %c0_1] : memref<8x256xf32, #tpu.memory_space<vmem>>, vector<1x256xf32>
    %c2 = arith.constant 2 : index
    %c0_2 = arith.constant 0 : index
    %2 = vector.load %arg6[%c2, %c0_2] : memref<8x256xf32, #tpu.memory_space<vmem>>, vector<1x128xf32>
    %c3 = arith.constant 3 : index
    %c0_3 = arith.constant 0 : index
    %3 = vector.load %arg6[%c3, %c0_3] : memref<8x256xf32, #tpu.memory_space<vmem>>, vector<1x128xf32>
    %c4 = arith.constant 4 : index
    %c0_4 = arith.constant 0 : index
    %4 = vector.load %arg6[%c4, %c0_4] : memref<8x256xf32, #tpu.memory_space<vmem>>, vector<1x128xf32>
    %c0_5 = arith.constant 0 : index
    %c0_6 = arith.constant 0 : index
    %5 = vector.load %arg1[%c0_5, %c0_6] : memref<8x128xf32, #tpu.memory_space<vmem>>, vector<8x128xf32>
    %6 = arith.truncf %5 : vector<8x128xf32> to vector<8x128xbf16>
    %c0_7 = arith.constant 0 : index
    %c0_8 = arith.constant 0 : index
    %7 = vector.load %arg2[%c0_7, %c0_8] : memref<128x256xbf16, #tpu.memory_space<vmem>>, vector<128x256xbf16>
    %cst = arith.constant dense<0.000000e+00> : vector<8x256xf32>
    %8 = tpu.matmul %6, %7, %cst {dimension_numbers = #tpu.dot_dimension_numbers<[1], [0], [0], [1], [0, 0, 1, 1], [], []>} : vector<8x128xbf16>, vector<128x256xbf16>, vector<8x256xf32> -> vector<8x256xf32>
    %9 = vector.broadcast %0 : vector<1x256xf32> to vector<8x256xf32>
    %10 = arith.addf %8, %9 : vector<8x256xf32>
    %cst_9 = arith.constant 0.000000e+00 : f32
    %11 = vector.broadcast %cst_9 : f32 to vector<8x256xf32>
    %12 = arith.maximumf %10, %11 : vector<8x256xf32>
    %13 = arith.truncf %12 : vector<8x256xf32> to vector<8x256xbf16>
    %c0_10 = arith.constant 0 : index
    %c0_11 = arith.constant 0 : index
    %14 = vector.load %arg3[%c0_10, %c0_11] : memref<256x256xbf16, #tpu.memory_space<vmem>>, vector<256x256xbf16>
    %cst_12 = arith.constant dense<0.000000e+00> : vector<8x256xf32>
    %15 = tpu.matmul %13, %14, %cst_12 {dimension_numbers = #tpu.dot_dimension_numbers<[1], [0], [0], [1], [0, 0, 1, 1], [], []>} : vector<8x256xbf16>, vector<256x256xbf16>, vector<8x256xf32> -> vector<8x256xf32>
    %16 = vector.broadcast %1 : vector<1x256xf32> to vector<8x256xf32>
    %17 = arith.addf %15, %16 : vector<8x256xf32>
    %cst_13 = arith.constant 0.000000e+00 : f32
    %18 = vector.broadcast %cst_13 : f32 to vector<8x256xf32>
    %19 = arith.maximumf %17, %18 : vector<8x256xf32>
    %20 = arith.truncf %19 : vector<8x256xf32> to vector<8x256xbf16>
    %c0_14 = arith.constant 0 : index
    %c0_15 = arith.constant 0 : index
    %21 = vector.load %arg4[%c0_14, %c0_15] : memref<256x128xbf16, #tpu.memory_space<vmem>>, vector<256x128xbf16>
    %cst_16 = arith.constant dense<0.000000e+00> : vector<8x128xf32>
    %22 = tpu.matmul %20, %21, %cst_16 {dimension_numbers = #tpu.dot_dimension_numbers<[1], [0], [0], [1], [0, 0, 1, 1], [], []>} : vector<8x256xbf16>, vector<256x128xbf16>, vector<8x128xf32> -> vector<8x128xf32>
    %23 = vector.broadcast %2 : vector<1x128xf32> to vector<8x128xf32>
    %24 = arith.addf %22, %23 : vector<8x128xf32>
    %cst_17 = arith.constant 0.000000e+00 : f32
    %25 = vector.broadcast %cst_17 : f32 to vector<8x128xf32>
    %26 = arith.maximumf %24, %25 : vector<8x128xf32>
    %27 = arith.truncf %26 : vector<8x128xf32> to vector<8x128xbf16>
    %c0_18 = arith.constant 0 : index
    %c0_19 = arith.constant 0 : index
    %28 = vector.load %arg5[%c0_18, %c0_19] : memref<128x128xbf16, #tpu.memory_space<vmem>>, vector<128x128xbf16>
    %cst_20 = arith.constant dense<0.000000e+00> : vector<8x128xf32>
    %29 = tpu.matmul %27, %28, %cst_20 {dimension_numbers = #tpu.dot_dimension_numbers<[1], [0], [0], [1], [0, 0, 1, 1], [], []>} : vector<8x128xbf16>, vector<128x128xbf16>, vector<8x128xf32> -> vector<8x128xf32>
    %30 = vector.broadcast %3 : vector<1x128xf32> to vector<8x128xf32>
    %31 = arith.addf %29, %30 : vector<8x128xf32>
    %cst_21 = arith.constant 0.000000e+00 : f32
    %32 = vector.broadcast %cst_21 : f32 to vector<8x128xf32>
    %33 = arith.maximumf %31, %32 : vector<8x128xf32>
    %34 = vector.broadcast %4 : vector<1x128xf32> to vector<8x128xf32>
    %35 = arith.mulf %33, %34 : vector<8x128xf32>
    %cst_22 = arith.constant dense<0.000000e+00> : vector<8xf32>
    %36 = vector.multi_reduction <add>, %35, %cst_22 [1] : vector<8x128xf32> to vector<8xf32>
    %37 = vector.shape_cast %36 : vector<8xf32> to vector<8x1xf32>
    %38 = arith.negf %37 : vector<8x1xf32>
    %39 = math.exp %38 : vector<8x1xf32>
    %cst_23 = arith.constant 1.000000e+00 : f32
    %40 = vector.broadcast %cst_23 : f32 to vector<8x1xf32>
    %41 = arith.addf %40, %39 : vector<8x1xf32>
    %42 = arith.divf %40, %41 : vector<8x1xf32>
    %c0_24 = arith.constant 0 : index
    %c0_25 = arith.constant 0 : index
    %43 = vector.load %arg7[%c0_24, %c0_25] : memref<8x1xf32, #tpu.memory_space<vmem>>, vector<8x1xf32>
    tpu.vector_store %arg7[%c0_24, %c0_25], %42 {strides = array<i32>} : memref<8x1xf32, #tpu.memory_space<vmem>>, vector<8x1xf32>,
    return
  }
  func.func @transform_0(%arg0: i32) -> (i32, i32) {
    %c0_i32 = arith.constant 0 : i32
    %c0_i32_0 = arith.constant 0 : i32
    return %arg0, %c0_i32 : i32, i32
  }
  func.func @transform_1(%arg0: i32) -> (i32, i32) {
    %c0_i32 = arith.constant 0 : i32
    %c0_i32_0 = arith.constant 0 : i32
    %c0_i32_1 = arith.constant 0 : i32
    return %c0_i32, %c0_i32_0 : i32, i32
  }
  func.func @transform_2(%arg0: i32) -> (i32, i32) {
    %c0_i32 = arith.constant 0 : i32
    %c0_i32_0 = arith.constant 0 : i32
    %c0_i32_1 = arith.constant 0 : i32
    return %c0_i32, %c0_i32_0 : i32, i32
  }
  func.func @transform_3(%arg0: i32) -> (i32, i32) {
    %c0_i32 = arith.constant 0 : i32
    %c0_i32_0 = arith.constant 0 : i32
    %c0_i32_1 = arith.constant 0 : i32
    return %c0_i32, %c0_i32_0 : i32, i32
  }
  func.func @transform_4(%arg0: i32) -> (i32, i32) {
    %c0_i32 = arith.constant 0 : i32
    %c0_i32_0 = arith.constant 0 : i32
    %c0_i32_1 = arith.constant 0 : i32
    return %c0_i32, %c0_i32_0 : i32, i32
  }
  func.func @transform_5(%arg0: i32) -> (i32, i32) {
    %c0_i32 = arith.constant 0 : i32
    %c0_i32_0 = arith.constant 0 : i32
    %c0_i32_1 = arith.constant 0 : i32
    return %c0_i32, %c0_i32_0 : i32, i32
  }
  func.func @transform_6(%arg0: i32) -> (i32, i32) {
    %c0_i32 = arith.constant 0 : i32
    %c0_i32_0 = arith.constant 0 : i32
    return %arg0, %c0_i32 : i32, i32
  }
}

</mosaic_0001>

<llo_original>
// kernel: tpu_custom_call.1
$region0: #{tpu_custom_call.1}
  #allocation0 [shape = 'u32[]', space=smem, size = 0x4, offset = 0x4, fixed_abs, tag = 'smem constant byte address 0x4 - core index']
  #allocation1 [shape = 'u32[144,128]{1,0:T(1,128)}', space=vmem, size = 0x12000, scoped, tag = 'internal scratch']
  %s0 = inlined_call_operand.hbm [shape: f32[8,128], index: 0, kind: input, shape index: {}]
  %s1 = inlined_call_operand.hbm [shape: bf16[128,256], index: 1, kind: input, shape index: {}]
  %s2 = inlined_call_operand.hbm [shape: bf16[256,256], index: 2, kind: input, shape index: {}]
  %s3 = inlined_call_operand.hbm [shape: bf16[256,128], index: 3, kind: input, shape index: {}]
  %s4 = inlined_call_operand.hbm [shape: bf16[128,128], index: 4, kind: input, shape index: {}]
  %s5 = inlined_call_operand.hbm [shape: f32[8,256], index: 5, kind: input, shape index: {}]
  %s6 = inlined_call_operand.vmem [shape: f32[8,1], index: 6, kind: output, shape index: {}]
  %s7 = sld [smem:[#allocation0]]
  $region58: #{tpu_custom_call.1} parent=0
    _
  %s9 = ssub.s32 1, %s7
  %s10 = scalar_select 0, %s9, %s7
  $region1: #{tpu_custom_call.1} parent=0
    #allocation2 [shape = 'u8[4096]{0}', space=vmem, size = 0x1000, scoped, tag = 'input window, operand 0, single buffered']
    #allocation3 [shape = 's32[1]{0}', space=sflag, size = 0x4, scoped, tag = 'scoped memory for tpu_custom_call.1']
    #allocation4 [shape = 'u8[65536]{0}', space=vmem, size = 0x10000, scoped, tag = 'input window, operand 1, single buffered']
    #allocation5 [shape = 's32[1]{0}', space=sflag, size = 0x4, scoped, tag = 'scoped memory for tpu_custom_call.1']
    #allocation6 [shape = 'u8[131072]{0}', space=vmem, size = 0x20000, scoped, tag = 'input window, operand 2, single buffered']
    #allocation7 [shape = 'u8[65536]{0}', space=vmem, size = 0x10000, scoped, tag = 'input window, operand 3, single buffered']
    #allocation8 [shape = 's32[1]{0}', space=sflag, size = 0x4, scoped, tag = 'scoped memory for tpu_custom_call.1']
    #allocation9 [shape = 'u8[32768]{0}', space=vmem, size = 0x8000, scoped, tag = 'input window, operand 4, single buffered']
    #allocation10 [shape = 'u8[8192]{0}', space=vmem, size = 0x2000, scoped, tag = 'input window, operand 5, single buffered']
    #allocation11 [shape = 's32[1]{0}', space=sflag, size = 0x4, scoped, tag = 'scoped memory for tpu_custom_call.1']
    %11 = vsyncpa [#allocation3], 0
    %12 = vsyncpa [#allocation5], 0
    %13 = vsyncpa [#allocation8], 0
    %14 = vsyncpa [#allocation11], 0
    // Predicated region
    $region2: #{tpu_custom_call.1} parent=1 // pred_check
      _
    $region3: #{tpu_custom_call.1} parent=1 // pred_check_branch
      %16 = sbr.rel (0) target = $region5
    $region4: #{tpu_custom_call.1} parent=1 // pred_region
      %s18 = ssub.s32 128, 128
      %19 = vsyncadd [#allocation3], %s18
      %s21 = sshll.u32 [#allocation2], 4
      %s22 = int_to_ptr.vmem [resolvable:$true] %s21
      %24 = dma.hbm_to_vmem [thread:$0]  %s0, 128, %s22, [#allocation3]
    $region5: #{tpu_custom_call.1} parent=1 // pred_fallthru
      _
    // Predicated region
    $region6: #{tpu_custom_call.1} parent=1 // pred_check
      _
    $region7: #{tpu_custom_call.1} parent=1 // pred_check_branch
      %26 = sbr.rel (0) target = $region9
    $region8: #{tpu_custom_call.1} parent=1 // pred_region
      %s28 = ssub.s32 2048, 2048
      %29 = vsyncadd [#allocation5], %s28
      %s30 = sshll.u32 [#allocation4], 4
      %s31 = int_to_ptr.vmem [resolvable:$true] %s30
      %36 = dma.hbm_to_vmem [thread:$0]  %s1, 2048, %s31, [#allocation5], 128, 128, 8
    $region9: #{tpu_custom_call.1} parent=1 // pred_fallthru
      _
    // Predicated region
    $region10: #{tpu_custom_call.1} parent=1 // pred_check
      _
    $region11: #{tpu_custom_call.1} parent=1 // pred_check_branch
      %38 = sbr.rel (0) target = $region13
    $region12: #{tpu_custom_call.1} parent=1 // pred_region
      %s40 = ssub.s32 4096, 4096
      %41 = vsyncadd [#allocation5], %s40
      %s42 = sshll.u32 [#allocation6], 4
      %s43 = int_to_ptr.vmem [resolvable:$true] %s42
      %48 = dma.hbm_to_vmem [thread:$0]  %s2, 4096, %s43, [#allocation5], 128, 128, 8
    $region13: #{tpu_custom_call.1} parent=1 // pred_fallthru
      _
    // Predicated region
    $region14: #{tpu_custom_call.1} parent=1 // pred_check
      _
    $region15: #{tpu_custom_call.1} parent=1 // pred_check_branch
      %50 = sbr.rel (0) target = $region17
    $region16: #{tpu_custom_call.1} parent=1 // pred_region
      %s52 = ssub.s32 2048, 2048
      %53 = vsyncadd [#allocation8], %s52
      %s54 = sshll.u32 [#allocation7], 4
      %s55 = int_to_ptr.vmem [resolvable:$true] %s54
      %60 = dma.hbm_to_vmem [thread:$0]  %s3, 2048, %s55, [#allocation8], 64, 64, 4
    $region17: #{tpu_custom_call.1} parent=1 // pred_fallthru
      _
    // Predicated region
    $region18: #{tpu_custom_call.1} parent=1 // pred_check
      _
    $region19: #{tpu_custom_call.1} parent=1 // pred_check_branch
      %62 = sbr.rel (0) target = $region21
    $region20: #{tpu_custom_call.1} parent=1 // pred_region
      %s64 = ssub.s32 1024, 1024
      %65 = vsyncadd [#allocation8], %s64
      %s66 = sshll.u32 [#allocation9], 4
      %s67 = int_to_ptr.vmem [resolvable:$true] %s66
      %72 = dma.hbm_to_vmem [thread:$0]  %s4, 1024, %s67, [#allocation8], 64, 64, 4
    $region21: #{tpu_custom_call.1} parent=1 // pred_fallthru
      _
    // Predicated region
    $region22: #{tpu_custom_call.1} parent=1 // pred_check
      _
    $region23: #{tpu_custom_call.1} parent=1 // pred_check_branch
      %74 = sbr.rel (0) target = $region25
    $region24: #{tpu_custom_call.1} parent=1 // pred_region
      %s76 = ssub.s32 256, 256
      %77 = vsyncadd [#allocation11], %s76
      %s79 = sshll.u32 [#allocation10], 4
      %s80 = int_to_ptr.vmem [resolvable:$true] %s79
      %82 = dma.hbm_to_vmem [thread:$0]  %s5, 256, %s80, [#allocation11]
    $region25: #{tpu_custom_call.1} parent=1 // pred_fallthru
      _
    // Predicated region
    $region26: #{tpu_custom_call.1} parent=1 // pred_check
      _
    $region27: #{tpu_custom_call.1} parent=1 // pred_check_branch
      %84 = sbr.rel (0) target = $region29
    $region28: #{tpu_custom_call.1} parent=1 // pred_region
      %85 = dma.done [#allocation3], 128
    $region29: #{tpu_custom_call.1} parent=1 // pred_fallthru
      _
    // Predicated region
    $region30: #{tpu_custom_call.1} parent=1 // pred_check
      _
    $region31: #{tpu_custom_call.1} parent=1 // pred_check_branch
      %87 = sbr.rel (0) target = $region33
    $region32: #{tpu_custom_call.1} parent=1 // pred_region
      %88 = dma.done [#allocation5], 2048
    $region33: #{tpu_custom_call.1} parent=1 // pred_fallthru
      _
    // Predicated region
    $region34: #{tpu_custom_call.1} parent=1 // pred_check
      _
    $region35: #{tpu_custom_call.1} parent=1 // pred_check_branch
      %90 = sbr.rel (0) target = $region37
    $region36: #{tpu_custom_call.1} parent=1 // pred_region
      %91 = dma.done [#allocation5], 4096
    $region37: #{tpu_custom_call.1} parent=1 // pred_fallthru
      _
    // Predicated region
    $region38: #{tpu_custom_call.1} parent=1 // pred_check
      _
    $region39: #{tpu_custom_call.1} parent=1 // pred_check_branch
      %93 = sbr.rel (0) target = $region41
    $region40: #{tpu_custom_call.1} parent=1 // pred_region
      %94 = dma.done [#allocation8], 2048
    $region41: #{tpu_custom_call.1} parent=1 // pred_fallthru
      _
    // Predicated region
    $region42: #{tpu_custom_call.1} parent=1 // pred_check
      _
    $region43: #{tpu_custom_call.1} parent=1 // pred_check_branch
      %96 = sbr.rel (0) target = $region45
    $region44: #{tpu_custom_call.1} parent=1 // pred_region
      %97 = dma.done [#allocation8], 1024
    $region45: #{tpu_custom_call.1} parent=1 // pred_fallthru
      _
    // Predicated region
    $region46: #{tpu_custom_call.1} parent=1 // pred_check
      _
    $region47: #{tpu_custom_call.1} parent=1 // pred_check_branch
      %99 = sbr.rel (0) target = $region49
    $region48: #{tpu_custom_call.1} parent=1 // pred_region
      %100 = dma.done [#allocation11], 256
    $region49: #{tpu_custom_call.1} parent=1 // pred_fallthru
      _
    %v102 = vld [vmem:[#allocation10] ss:$8 sm:$0x3]
    %s103 = scalar_lea.vmem [#allocation10], 1
    %v104 = vld [vmem:[%s103] ss:$8 sm:$0x3]
    %v105 = vld [vmem:[#allocation10 + $0x2] ss:$0 sm:$0xff]
    %v106 = vld [vmem:[#allocation10 + $0x3] ss:$0 sm:$0xff]
    %v107 = vld [vmem:[#allocation10 + $0x4] ss:$0 sm:$0xff]
    %v108 = vld [vmem:[#allocation2] sm:$0xff]
    %v109 = vpack.c.bf16 %v108, %v108
    %v110 = vld [vmem:[#allocation4] sm:$0xff]
    %v111 = vld [vmem:[#allocation4 + $0x8] sm:$0xff]
    %v112 = vld [vmem:[#allocation4 + $0x10] sm:$0xff]
    %v113 = vld [vmem:[#allocation4 + $0x18] sm:$0xff]
    %v114 = vld [vmem:[#allocation4 + $0x20] sm:$0xff]
    %v115 = vld [vmem:[#allocation4 + $0x28] sm:$0xff]
    %v116 = vld [vmem:[#allocation4 + $0x30] sm:$0xff]
    %v117 = vld [vmem:[#allocation4 + $0x38] sm:$0xff]
    %v118 = vld [vmem:[#allocation4 + $0x40] sm:$0xff]
    %v119 = vld [vmem:[#allocation4 + $0x48] sm:$0xff]
    %v120 = vld [vmem:[#allocation4 + $0x50] sm:$0xff]
    %v121 = vld [vmem:[#allocation4 + $0x58] sm:$0xff]
    %v122 = vld [vmem:[#allocation4 + $0x60] sm:$0xff]
    %v123 = vld [vmem:[#allocation4 + $0x68] sm:$0xff]
    %v124 = vld [vmem:[#allocation4 + $0x70] sm:$0xff]
    %v125 = vld [vmem:[#allocation4 + $0x78] sm:$0xff]
    %v127 = vlaneseq
    %v128 = vshrl.u32 %v127, 7
    %v129 = vsub.s32 0, %v128
    %v130 = vrot.slane %v102, %v129
    %v131 = vlaneseq
    %v132 = vshrl.u32 %v131, 7
    %v133 = vsub.s32 1, %v132
    %v134 = vrot.slane %v102, %v133
    %v153 = vunpack.c.l.b16 %v110
    %v154 = vunpack.c.h.b16 %v110
    %v155 = vunpack.c.l.b16 %v111
    %v156 = vunpack.c.h.b16 %v111
    %v157 = vunpack.c.l.b16 %v112
    %v158 = vunpack.c.h.b16 %v112
    %v159 = vunpack.c.l.b16 %v113
    %v160 = vunpack.c.h.b16 %v113
    %v161 = vunpack.c.l.b16 %v114
    %v162 = vunpack.c.h.b16 %v114
    %v163 = vunpack.c.l.b16 %v115
    %v164 = vunpack.c.h.b16 %v115
    %v165 = vunpack.c.l.b16 %v116
    %v166 = vunpack.c.h.b16 %v116
    %v167 = vunpack.c.l.b16 %v117
    %v168 = vunpack.c.h.b16 %v117
    %v169 = vunpack.c.l.b16 %v118
    %v170 = vunpack.c.h.b16 %v118
    %v171 = vunpack.c.l.b16 %v119
    %v172 = vunpack.c.h.b16 %v119
    %v173 = vunpack.c.l.b16 %v120
    %v174 = vunpack.c.h.b16 %v120
    %v175 = vunpack.c.l.b16 %v121
    %v176 = vunpack.c.h.b16 %v121
    %v177 = vunpack.c.l.b16 %v122
    %v178 = vunpack.c.h.b16 %v122
    %v179 = vunpack.c.l.b16 %v123
    %v180 = vunpack.c.h.b16 %v123
    %v181 = vunpack.c.l.b16 %v124
    %v182 = vunpack.c.h.b16 %v124
    %v183 = vunpack.c.l.b16 %v125
    %v184 = vunpack.c.h.b16 %v125
    %v185 = vpack.c.b16 %v155, %v153
    %v186 = vpack.c.b16 %v156, %v154
    %v187 = vpack.c.b16 %v159, %v157
    %v188 = vpack.c.b16 %v160, %v158
    %v189 = vpack.c.b16 %v163, %v161
    %v190 = vpack.c.b16 %v164, %v162
    %v191 = vpack.c.b16 %v167, %v165
    %v192 = vpack.c.b16 %v168, %v166
    %v193 = vpack.c.b16 %v171, %v169
    %v194 = vpack.c.b16 %v172, %v170
    %v195 = vpack.c.b16 %v175, %v173
    %v196 = vpack.c.b16 %v176, %v174
    %v197 = vpack.c.b16 %v179, %v177
    %v198 = vpack.c.b16 %v180, %v178
    %v199 = vpack.c.b16 %v183, %v181
    %v200 = vpack.c.b16 %v184, %v182
    %217 = vmatprep.subr.bf16.mxu0 %v200
    %218 = vmatpush1.bf16.msra.mxu0 %v199
    %219 = vmatprep.subr.bf16.mxu0 %v198
    %220 = vmatpush1.bf16.msra.mxu0 %v197
    %221 = vmatprep.subr.bf16.mxu0 %v196
    %222 = vmatpush1.bf16.msra.mxu0 %v195
    %223 = vmatprep.subr.bf16.mxu0 %v194
    %224 = vmatpush1.bf16.msra.mxu0 %v193
    %225 = vmatprep.subr.bf16.mxu0 %v192
    %226 = vmatpush1.bf16.msra.mxu0 %v191
    %227 = vmatprep.subr.bf16.mxu0 %v190
    %228 = vmatpush1.bf16.msra.mxu0 %v189
    %229 = vmatprep.subr.bf16.mxu0 %v188
    %230 = vmatpush1.bf16.msra.mxu0 %v187
    %231 = vmatprep.subr.bf16.mxu0 %v186
    %232 = vmatpush1.bf16.msra.mxu0 %v185
    %233 = vmatprep.subr.bf16.mxu0 0
    %234 = vmatpush2.bf16.msra.mxu0 0
    %235 = vmatprep.subr.bf16.mxu0 0
    %236 = vmatpush2.bf16.msra.mxu0 0
    %237 = vmatprep.subr.bf16.mxu0 0
    %238 = vmatpush2.bf16.msra.mxu0 0
    %239 = vmatprep.subr.bf16.mxu0 0
    %240 = vmatpush2.bf16.msra.mxu0 0
    %241 = vmatprep.subr.bf16.mxu0 0
    %242 = vmatpush2.bf16.msra.mxu0 0
    %243 = vmatprep.subr.bf16.mxu0 0
    %244 = vmatpush2.bf16.msra.mxu0 0
    %245 = vmatprep.subr.bf16.mxu0 0
    %246 = vmatpush2.bf16.msra.mxu0 0
    %247 = vmatprep.subr.bf16.mxu0 0
    %248 = vmatpush2.bf16.msra.mxu0 0
    %249 = vmatprep.mubr.bf16.mxu0 0
    %250 = vmatmul.mubr.bf16.gmra.mxu0 %v109
    %v251 = vpop.f32.mrf.mxu0
    %v252 = vadd.f32 %v130, %v251
    %v253 = vpop.f32.mrf.mxu0
    %v254 = vadd.f32 %v134, %v253
    %v255 = vpop.f32.mrf.mxu0
    %v256 = vpop.f32.mrf.mxu0
    %257 = vdwg.mxu0
    %v258 = vmax.f32 %v252, 0.0
    %v259 = vmax.f32 %v254, 0.0
    %v260 = vpack.c.bf16 %v258, %v258
    %v261 = vpack.c.bf16 %v259, %v259
    %v262 = vld [vmem:[#allocation6] sm:$0xff]
    %v263 = vld [vmem:[#allocation6 + $0x8] sm:$0xff]
    %v264 = vld [vmem:[#allocation6 + $0x10] sm:$0xff]
    %v265 = vld [vmem:[#allocation6 + $0x18] sm:$0xff]
    %v266 = vld [vmem:[#allocation6 + $0x20] sm:$0xff]
    %v267 = vld [vmem:[#allocation6 + $0x28] sm:$0xff]
    %v268 = vld [vmem:[#allocation6 + $0x30] sm:$0xff]
    %v269 = vld [vmem:[#allocation6 + $0x38] sm:$0xff]
    %v270 = vld [vmem:[#allocation6 + $0x40] sm:$0xff]
    %v271 = vld [vmem:[#allocation6 + $0x48] sm:$0xff]
    %v272 = vld [vmem:[#allocation6 + $0x50] sm:$0xff]
    %v273 = vld [vmem:[#allocation6 + $0x58] sm:$0xff]
    %v274 = vld [vmem:[#allocation6 + $0x60] sm:$0xff]
    %v275 = vld [vmem:[#allocation6 + $0x68] sm:$0xff]
    %v276 = vld [vmem:[#allocation6 + $0x70] sm:$0xff]
    %v277 = vld [vmem:[#allocation6 + $0x78] sm:$0xff]
    %v278 = vld [vmem:[#allocation6 + $0x80] sm:$0xff]
    %v279 = vld [vmem:[#allocation6 + $0x88] sm:$0xff]
    %v280 = vld [vmem:[#allocation6 + $0x90] sm:$0xff]
    %v281 = vld [vmem:[#allocation6 + $0x98] sm:$0xff]
    %v282 = vld [vmem:[#allocation6 + $0xa0] sm:$0xff]
    %v283 = vld [vmem:[#allocation6 + $0xa8] sm:$0xff]
    %v284 = vld [vmem:[#allocation6 + $0xb0] sm:$0xff]
    %v285 = vld [vmem:[#allocation6 + $0xb8] sm:$0xff]
    %v286 = vld [vmem:[#allocation6 + $0xc0] sm:$0xff]
    %v287 = vld [vmem:[#allocation6 + $0xc8] sm:$0xff]
    %v288 = vld [vmem:[#allocation6 + $0xd0] sm:$0xff]
    %v289 = vld [vmem:[#allocation6 + $0xd8] sm:$0xff]
    %v290 = vld [vmem:[#allocation6 + $0xe0] sm:$0xff]
    %v291 = vld [vmem:[#allocation6 + $0xe8] sm:$0xff]
    %v292 = vld [vmem:[#allocation6 + $0xf0] sm:$0xff]
    %v293 = vld [vmem:[#allocation6 + $0xf8] sm:$0xff]
    %v295 = vlaneseq
    %v296 = vshrl.u32 %v295, 7
    %v297 = vsub.s32 0, %v296
    %v298 = vrot.slane %v104, %v297
    %v299 = vlaneseq
    %v300 = vshrl.u32 %v299, 7
    %v301 = vsub.s32 1, %v300
    %v302 = vrot.slane %v104, %v301
    %v337 = vunpack.c.l.b16 %v262
    %v338 = vunpack.c.h.b16 %v262
    %v339 = vunpack.c.l.b16 %v263
    %v340 = vunpack.c.h.b16 %v263
    %v341 = vunpack.c.l.b16 %v264
    %v342 = vunpack.c.h.b16 %v264
    %v343 = vunpack.c.l.b16 %v265
    %v344 = vunpack.c.h.b16 %v265
    %v345 = vunpack.c.l.b16 %v266
    %v346 = vunpack.c.h.b16 %v266
    %v347 = vunpack.c.l.b16 %v267
    %v348 = vunpack.c.h.b16 %v267
    %v349 = vunpack.c.l.b16 %v268
    %v350 = vunpack.c.h.b16 %v268
    %v351 = vunpack.c.l.b16 %v269
    %v352 = vunpack.c.h.b16 %v269
    %v353 = vunpack.c.l.b16 %v270
    %v354 = vunpack.c.h.b16 %v270
    %v355 = vunpack.c.l.b16 %v271
    %v356 = vunpack.c.h.b16 %v271
    %v357 = vunpack.c.l.b16 %v272
    %v358 = vunpack.c.h.b16 %v272
    %v359 = vunpack.c.l.b16 %v273
    %v360 = vunpack.c.h.b16 %v273
    %v361 = vunpack.c.l.b16 %v274
    %v362 = vunpack.c.h.b16 %v274
    %v363 = vunpack.c.l.b16 %v275
    %v364 = vunpack.c.h.b16 %v275
    %v365 = vunpack.c.l.b16 %v276
    %v366 = vunpack.c.h.b16 %v276
    %v367 = vunpack.c.l.b16 %v277
    %v368 = vunpack.c.h.b16 %v277
    %v369 = vunpack.c.l.b16 %v278
    %v370 = vunpack.c.h.b16 %v278
    %v371 = vunpack.c.l.b16 %v279
    %v372 = vunpack.c.h.b16 %v279
    %v373 = vunpack.c.l.b16 %v280
    %v374 = vunpack.c.h.b16 %v280
    %v375 = vunpack.c.l.b16 %v281
    %v376 = vunpack.c.h.b16 %v281
    %v377 = vunpack.c.l.b16 %v282
    %v378 = vunpack.c.h.b16 %v282
    %v379 = vunpack.c.l.b16 %v283
    %v380 = vunpack.c.h.b16 %v283
    %v381 = vunpack.c.l.b16 %v284
    %v382 = vunpack.c.h.b16 %v284
    %v383 = vunpack.c.l.b16 %v285
    %v384 = vunpack.c.h.b16 %v285
    %v385 = vunpack.c.l.b16 %v286
    %v386 = vunpack.c.h.b16 %v286
    %v387 = vunpack.c.l.b16 %v287
    %v388 = vunpack.c.h.b16 %v287
    %v389 = vunpack.c.l.b16 %v288
    %v390 = vunpack.c.h.b16 %v288
    %v391 = vunpack.c.l.b16 %v289
    %v392 = vunpack.c.h.b16 %v289
    %v393 = vunpack.c.l.b16 %v290
    %v394 = vunpack.c.h.b16 %v290
    %v395 = vunpack.c.l.b16 %v291
    %v396 = vunpack.c.h.b16 %v291
    %v397 = vunpack.c.l.b16 %v292
    %v398 = vunpack.c.h.b16 %v292
    %v399 = vunpack.c.l.b16 %v293
    %v400 = vunpack.c.h.b16 %v293
    %v401 = vpack.c.b16 %v339, %v337
    %v402 = vpack.c.b16 %v340, %v338
    %v403 = vpack.c.b16 %v343, %v341
    %v404 = vpack.c.b16 %v344, %v342
    %v405 = vpack.c.b16 %v347, %v345
    %v406 = vpack.c.b16 %v348, %v346
    %v407 = vpack.c.b16 %v351, %v349
    %v408 = vpack.c.b16 %v352, %v350
    %v409 = vpack.c.b16 %v355, %v353
    %v410 = vpack.c.b16 %v356, %v354
    %v411 = vpack.c.b16 %v359, %v357
    %v412 = vpack.c.b16 %v360, %v358
    %v413 = vpack.c.b16 %v363, %v361
    %v414 = vpack.c.b16 %v364, %v362
    %v415 = vpack.c.b16 %v367, %v365
    %v416 = vpack.c.b16 %v368, %v366
    %v417 = vpack.c.b16 %v371, %v369
    %v418 = vpack.c.b16 %v372, %v370
    %v419 = vpack.c.b16 %v375, %v373
    %v420 = vpack.c.b16 %v376, %v374
    %v421 = vpack.c.b16 %v379, %v377
    %v422 = vpack.c.b16 %v380, %v378
    %v423 = vpack.c.b16 %v383, %v381
    %v424 = vpack.c.b16 %v384, %v382
    %v425 = vpack.c.b16 %v387, %v385
    %v426 = vpack.c.b16 %v388, %v386
    %v427 = vpack.c.b16 %v391, %v389
    %v428 = vpack.c.b16 %v392, %v390
    %v429 = vpack.c.b16 %v395, %v393
    %v430 = vpack.c.b16 %v396, %v394
    %v431 = vpack.c.b16 %v399, %v397
    %v432 = vpack.c.b16 %v400, %v398
    %465 = vmatprep.subr.bf16.mxu0 %v416
    %466 = vmatpush1.bf16.msra.mxu0 %v415
    %467 = vmatprep.subr.bf16.mxu0 %v414
    %468 = vmatpush1.bf16.msra.mxu0 %v413
    %469 = vmatprep.subr.bf16.mxu0 %v412
    %470 = vmatpush1.bf16.msra.mxu0 %v411
    %471 = vmatprep.subr.bf16.mxu0 %v410
    %472 = vmatpush1.bf16.msra.mxu0 %v409
    %473 = vmatprep.subr.bf16.mxu0 %v408
    %474 = vmatpush1.bf16.msra.mxu0 %v407
    %475 = vmatprep.subr.bf16.mxu0 %v406
    %476 = vmatpush1.bf16.msra.mxu0 %v405
    %477 = vmatprep.subr.bf16.mxu0 %v404
    %478 = vmatpush1.bf16.msra.mxu0 %v403
    %479 = vmatprep.subr.bf16.mxu0 %v402
    %480 = vmatpush1.bf16.msra.mxu0 %v401
    %481 = vmatprep.subr.bf16.mxu0 %v432
    %482 = vmatpush2.bf16.msra.mxu0 %v431
    %483 = vmatprep.subr.bf16.mxu0 %v430
    %484 = vmatpush2.bf16.msra.mxu0 %v429
    %485 = vmatprep.subr.bf16.mxu0 %v428
    %486 = vmatpush2.bf16.msra.mxu0 %v427
    %487 = vmatprep.subr.bf16.mxu0 %v426
    %488 = vmatpush2.bf16.msra.mxu0 %v425
    %489 = vmatprep.subr.bf16.mxu0 %v424
    %490 = vmatpush2.bf16.msra.mxu0 %v423
    %491 = vmatprep.subr.bf16.mxu0 %v422
    %492 = vmatpush2.bf16.msra.mxu0 %v421
    %493 = vmatprep.subr.bf16.mxu0 %v420
    %494 = vmatpush2.bf16.msra.mxu0 %v419
    %495 = vmatprep.subr.bf16.mxu0 %v418
    %496 = vmatpush2.bf16.msra.mxu0 %v417
    %497 = vmatprep.mubr.bf16.mxu0 %v261
    %498 = vmatmul.mubr.bf16.gmra.mxu0 %v260
    %v499 = vpop.f32.mrf.mxu0
    %v500 = vadd.f32 %v298, %v499
    %v501 = vpop.f32.mrf.mxu0
    %v502 = vadd.f32 %v302, %v501
    %v503 = vpop.f32.mrf.mxu0
    %v504 = vpop.f32.mrf.mxu0
    %505 = vdwg.mxu0
    %v506 = vmax.f32 %v500, 0.0
    %v507 = vmax.f32 %v502, 0.0
    %v508 = vpack.c.bf16 %v506, %v506
    %v509 = vpack.c.bf16 %v507, %v507
    %v510 = vld [vmem:[#allocation7] sm:$0xf]
    %v511 = vld [vmem:[#allocation7 + $0x4] sm:$0xf]
    %v512 = vld [vmem:[#allocation7 + $0x8] sm:$0xf]
    %v513 = vld [vmem:[#allocation7 + $0xc] sm:$0xf]
    %v514 = vld [vmem:[#allocation7 + $0x10] sm:$0xf]
    %v515 = vld [vmem:[#allocation7 + $0x14] sm:$0xf]
    %v516 = vld [vmem:[#allocation7 + $0x18] sm:$0xf]
    %v517 = vld [vmem:[#allocation7 + $0x1c] sm:$0xf]
    %v518 = vld [vmem:[#allocation7 + $0x20] sm:$0xf]
    %v519 = vld [vmem:[#allocation7 + $0x24] sm:$0xf]
    %v520 = vld [vmem:[#allocation7 + $0x28] sm:$0xf]
    %v521 = vld [vmem:[#allocation7 + $0x2c] sm:$0xf]
    %v522 = vld [vmem:[#allocation7 + $0x30] sm:$0xf]
    %v523 = vld [vmem:[#allocation7 + $0x34] sm:$0xf]
    %v524 = vld [vmem:[#allocation7 + $0x38] sm:$0xf]
    %v525 = vld [vmem:[#allocation7 + $0x3c] sm:$0xf]
    %v526 = vld [vmem:[#allocation7 + $0x40] sm:$0xf]
    %v527 = vld [vmem:[#allocation7 + $0x44] sm:$0xf]
    %v528 = vld [vmem:[#allocation7 + $0x48] sm:$0xf]
    %v529 = vld [vmem:[#allocation7 + $0x4c] sm:$0xf]
    %v530 = vld [vmem:[#allocation7 + $0x50] sm:$0xf]
    %v531 = vld [vmem:[#allocation7 + $0x54] sm:$0xf]
    %v532 = vld [vmem:[#allocation7 + $0x58] sm:$0xf]
    %v533 = vld [vmem:[#allocation7 + $0x5c] sm:$0xf]
    %v534 = vld [vmem:[#allocation7 + $0x60] sm:$0xf]
    %v535 = vld [vmem:[#allocation7 + $0x64] sm:$0xf]
    %v536 = vld [vmem:[#allocation7 + $0x68] sm:$0xf]
    %v537 = vld [vmem:[#allocation7 + $0x6c] sm:$0xf]
    %v538 = vld [vmem:[#allocation7 + $0x70] sm:$0xf]
    %v539 = vld [vmem:[#allocation7 + $0x74] sm:$0xf]
    %v540 = vld [vmem:[#allocation7 + $0x78] sm:$0xf]
    %v541 = vld [vmem:[#allocation7 + $0x7c] sm:$0xf]
    %v574 = vunpack.c.l.b16 %v510
    %v575 = vunpack.c.l.b16 %v511
    %v576 = vunpack.c.l.b16 %v512
    %v577 = vunpack.c.l.b16 %v513
    %v578 = vunpack.c.l.b16 %v514
    %v579 = vunpack.c.l.b16 %v515
    %v580 = vunpack.c.l.b16 %v516
    %v581 = vunpack.c.l.b16 %v517
    %v582 = vunpack.c.l.b16 %v518
    %v583 = vunpack.c.l.b16 %v519
    %v584 = vunpack.c.l.b16 %v520
    %v585 = vunpack.c.l.b16 %v521
    %v586 = vunpack.c.l.b16 %v522
    %v587 = vunpack.c.l.b16 %v523
    %v588 = vunpack.c.l.b16 %v524
    %v589 = vunpack.c.l.b16 %v525
    %v590 = vunpack.c.l.b16 %v526
    %v591 = vunpack.c.l.b16 %v527
    %v592 = vunpack.c.l.b16 %v528
    %v593 = vunpack.c.l.b16 %v529
    %v594 = vunpack.c.l.b16 %v530
    %v595 = vunpack.c.l.b16 %v531
    %v596 = vunpack.c.l.b16 %v532
    %v597 = vunpack.c.l.b16 %v533
    %v598 = vunpack.c.l.b16 %v534
    %v599 = vunpack.c.l.b16 %v535
    %v600 = vunpack.c.l.b16 %v536
    %v601 = vunpack.c.l.b16 %v537
    %v602 = vunpack.c.l.b16 %v538
    %v603 = vunpack.c.l.b16 %v539
    %v604 = vunpack.c.l.b16 %v540
    %v605 = vunpack.c.l.b16 %v541
    %v606 = vpack.c.b16 %v575, %v574
    %v607 = vpack.c.b16 %v577, %v576
    %v608 = vpack.c.b16 %v579, %v578
    %v609 = vpack.c.b16 %v581, %v580
    %v610 = vpack.c.b16 %v583, %v582
    %v611 = vpack.c.b16 %v585, %v584
    %v612 = vpack.c.b16 %v587, %v586
    %v613 = vpack.c.b16 %v589, %v588
    %v614 = vpack.c.b16 %v591, %v590
    %v615 = vpack.c.b16 %v593, %v592
    %v616 = vpack.c.b16 %v595, %v594
    %v617 = vpack.c.b16 %v597, %v596
    %v618 = vpack.c.b16 %v599, %v598
    %v619 = vpack.c.b16 %v601, %v600
    %v620 = vpack.c.b16 %v603, %v602
    %v621 = vpack.c.b16 %v605, %v604
    %638 = vmatprep.subr.bf16.mxu0 0
    %639 = vmatpush1.bf16.msra.mxu0 %v613
    %640 = vmatprep.subr.bf16.mxu0 0
    %641 = vmatpush1.bf16.msra.mxu0 %v612
    %642 = vmatprep.subr.bf16.mxu0 0
    %643 = vmatpush1.bf16.msra.mxu0 %v611
    %644 = vmatprep.subr.bf16.mxu0 0
    %645 = vmatpush1.bf16.msra.mxu0 %v610
    %646 = vmatprep.subr.bf16.mxu0 0
    %647 = vmatpush1.bf16.msra.mxu0 %v609
    %648 = vmatprep.subr.bf16.mxu0 0
    %649 = vmatpush1.bf16.msra.mxu0 %v608
    %650 = vmatprep.subr.bf16.mxu0 0
    %651 = vmatpush1.bf16.msra.mxu0 %v607
    %652 = vmatprep.subr.bf16.mxu0 0
    %653 = vmatpush1.bf16.msra.mxu0 %v606
    %654 = vmatprep.subr.bf16.mxu0 0
    %655 = vmatpush2.bf16.msra.mxu0 %v621
    %656 = vmatprep.subr.bf16.mxu0 0
    %657 = vmatpush2.bf16.msra.mxu0 %v620
    %658 = vmatprep.subr.bf16.mxu0 0
    %659 = vmatpush2.bf16.msra.mxu0 %v619
    %660 = vmatprep.subr.bf16.mxu0 0
    %661 = vmatpush2.bf16.msra.mxu0 %v618
    %662 = vmatprep.subr.bf16.mxu0 0
    %663 = vmatpush2.bf16.msra.mxu0 %v617
    %664 = vmatprep.subr.bf16.mxu0 0
    %665 = vmatpush2.bf16.msra.mxu0 %v616
    %666 = vmatprep.subr.bf16.mxu0 0
    %667 = vmatpush2.bf16.msra.mxu0 %v615
    %668 = vmatprep.subr.bf16.mxu0 0
    %669 = vmatpush2.bf16.msra.mxu0 %v614
    %670 = vmatprep.mubr.bf16.mxu0 %v509
    %671 = vmatmul.mubr.bf16.gmra.mxu0 %v508
    %v672 = vpop.f32.mrf.mxu0
    %v673 = vadd.f32 %v105, %v672
    %v674 = vpop.f32.mrf.mxu0
    %v675 = vpop.f32.mrf.mxu0
    %v676 = vpop.f32.mrf.mxu0
    %677 = vdwg.mxu0
    %v678 = vmax.f32 %v673, 0.0
    %v679 = vpack.c.bf16 %v678, %v678
    %v680 = vld [vmem:[#allocation9] sm:$0xf]
    %v681 = vld [vmem:[#allocation9 + $0x4] sm:$0xf]
    %v682 = vld [vmem:[#allocation9 + $0x8] sm:$0xf]
    %v683 = vld [vmem:[#allocation9 + $0xc] sm:$0xf]
    %v684 = vld [vmem:[#allocation9 + $0x10] sm:$0xf]
    %v685 = vld [vmem:[#allocation9 + $0x14] sm:$0xf]
    %v686 = vld [vmem:[#allocation9 + $0x18] sm:$0xf]
    %v687 = vld [vmem:[#allocation9 + $0x1c] sm:$0xf]
    %v688 = vld [vmem:[#allocation9 + $0x20] sm:$0xf]
    %v689 = vld [vmem:[#allocation9 + $0x24] sm:$0xf]
    %v690 = vld [vmem:[#allocation9 + $0x28] sm:$0xf]
    %v691 = vld [vmem:[#allocation9 + $0x2c] sm:$0xf]
    %v692 = vld [vmem:[#allocation9 + $0x30] sm:$0xf]
    %v693 = vld [vmem:[#allocation9 + $0x34] sm:$0xf]
    %v694 = vld [vmem:[#allocation9 + $0x38] sm:$0xf]
    %v695 = vld [vmem:[#allocation9 + $0x3c] sm:$0xf]
    %v712 = vunpack.c.l.b16 %v680
    %v713 = vunpack.c.l.b16 %v681
    %v714 = vunpack.c.l.b16 %v682
    %v715 = vunpack.c.l.b16 %v683
    %v716 = vunpack.c.l.b16 %v684
    %v717 = vunpack.c.l.b16 %v685
    %v718 = vunpack.c.l.b16 %v686
    %v719 = vunpack.c.l.b16 %v687
    %v720 = vunpack.c.l.b16 %v688
    %v721 = vunpack.c.l.b16 %v689
    %v722 = vunpack.c.l.b16 %v690
    %v723 = vunpack.c.l.b16 %v691
    %v724 = vunpack.c.l.b16 %v692
    %v725 = vunpack.c.l.b16 %v693
    %v726 = vunpack.c.l.b16 %v694
    %v727 = vunpack.c.l.b16 %v695
    %v728 = vpack.c.b16 %v713, %v712
    %v729 = vpack.c.b16 %v715, %v714
    %v730 = vpack.c.b16 %v717, %v716
    %v731 = vpack.c.b16 %v719, %v718
    %v732 = vpack.c.b16 %v721, %v720
    %v733 = vpack.c.b16 %v723, %v722
    %v734 = vpack.c.b16 %v725, %v724
    %v735 = vpack.c.b16 %v727, %v726
    %744 = vmatprep.subr.bf16.mxu0 0
    %745 = vmatpush1.bf16.msra.mxu0 %v735
    %746 = vmatprep.subr.bf16.mxu0 0
    %747 = vmatpush1.bf16.msra.mxu0 %v734
    %748 = vmatprep.subr.bf16.mxu0 0
    %749 = vmatpush1.bf16.msra.mxu0 %v733
    %750 = vmatprep.subr.bf16.mxu0 0
    %751 = vmatpush1.bf16.msra.mxu0 %v732
    %752 = vmatprep.subr.bf16.mxu0 0
    %753 = vmatpush1.bf16.msra.mxu0 %v731
    %754 = vmatprep.subr.bf16.mxu0 0
    %755 = vmatpush1.bf16.msra.mxu0 %v730
    %756 = vmatprep.subr.bf16.mxu0 0
    %757 = vmatpush1.bf16.msra.mxu0 %v729
    %758 = vmatprep.subr.bf16.mxu0 0
    %759 = vmatpush1.bf16.msra.mxu0 %v728
    %760 = vmatprep.subr.bf16.mxu0 0
    %761 = vmatpush2.bf16.msra.mxu0 0
    %762 = vmatprep.subr.bf16.mxu0 0
    %763 = vmatpush2.bf16.msra.mxu0 0
    %764 = vmatprep.subr.bf16.mxu0 0
    %765 = vmatpush2.bf16.msra.mxu0 0
    %766 = vmatprep.subr.bf16.mxu0 0
    %767 = vmatpush2.bf16.msra.mxu0 0
    %768 = vmatprep.subr.bf16.mxu0 0
    %769 = vmatpush2.bf16.msra.mxu0 0
    %770 = vmatprep.subr.bf16.mxu0 0
    %771 = vmatpush2.bf16.msra.mxu0 0
    %772 = vmatprep.subr.bf16.mxu0 0
    %773 = vmatpush2.bf16.msra.mxu0 0
    %774 = vmatprep.subr.bf16.mxu0 0
    %775 = vmatpush2.bf16.msra.mxu0 0
    %776 = vmatprep.mubr.bf16.mxu0 0
    %777 = vmatmul.mubr.bf16.gmra.mxu0 %v679
    %v778 = vpop.f32.mrf.mxu0
    %v779 = vadd.f32 %v106, %v778
    %v780 = vpop.f32.mrf.mxu0
    %v781 = vpop.f32.mrf.mxu0
    %v782 = vpop.f32.mrf.mxu0
    %783 = vdwg.mxu0
    %v784 = vmax.f32 %v779, 0.0
    %v785 = vmul.f32 %v784, %v107
    %786 = vadd.xlane.f32.xlu0 %v785
    %v787 = vpop.xlane.xlu0 %786
    %v788 = vxor.u32 %v787, 2147483648
    %v789 = vmul.f32 %v788, 1.442695
    %v790 = vpow.pop %v789
    %v791 = vadd.f32 %v790, 1.0
    %v792 = vrcp.pop %v791
    %v793 = vmul.f32 1.0, %v792
    %vm794 = vcmask 7168
    %795 = vst.msk [vmem:[%s6] sm:$0xff] %vm794, %v793
    // Predicated region
    $region50: #{tpu_custom_call.1} parent=1 // pred_check
      _
    $region51: #{tpu_custom_call.1} parent=1 // pred_check_branch
      %797 = sbr.rel (0) target = $region53
    $region52: #{tpu_custom_call.1} parent=1 // pred_region
      _
    $region53: #{tpu_custom_call.1} parent=1 // pred_fallthru
      _
    // Predicated region
    $region54: #{tpu_custom_call.1} parent=1 // pred_check
      _
    $region55: #{tpu_custom_call.1} parent=1 // pred_check_branch
      %799 = sbr.rel (0) target = $region57
    $region56: #{tpu_custom_call.1} parent=1 // pred_region
      _
    $region57: #{tpu_custom_call.1} parent=1 // pred_fallthru
      _
    %800 = vsyncpa [#allocation3], 1
    %801 = vsyncpa [#allocation5], 1
    %802 = vsyncpa [#allocation8], 1
    %803 = vsyncpa [#allocation11], 1

</llo_original>
